<compile_context>
chip_gen: v7x
topology: tpu7x:2x2x1
jax: 0.10.0
libtpu: 0.0.40
codegen_flags: <defaults>
</compile_context>

<pallas_src>
import jax
import jax.numpy as jnp
from jax import lax
from jax.experimental import pallas as pl
from jax.experimental.pallas import tpu as pltpu


LANES = 128
SUBLANES = 8
CHUNK_ROWS = 256      # rows per inner-loop step: 32 vregs of f32 diff, fits regfile
MAX_TILE_ROWS = 8192  # 8192 * 128 * 4B = 4 MiB per f32 input block


def _cdiv(a, b):
    return -(-a // b)


def _round_up(a, b):
    return _cdiv(a, b) * b


def _make_kernel(rows, tile_r, chunk_r, nsteps, last_valid):
    """Build the reduction kernel for a (rows, 128) operand pair tiled into
    (tile_r, 128) row blocks.  All arguments are static Python ints."""
    ragged = last_valid < tile_r

    def accum(x_ref, t_ref, nrows_valid):
        """sum(d^2) and sum(|d|) over rows [0, nrows_valid) of this block,
        folded into one (8, 128) f32 slab each (pure VPU adds; the single
        cross-sublane/lane reduce happens once in the wrapper)."""
        zero = jnp.zeros((SUBLANES, LANES), jnp.float32)

        def contrib(r0, nrows_load, nrows_keep):
            # nrows_load: static multiple of SUBLANES; nrows_keep <= nrows_load.
            x = x_ref[pl.ds(r0, nrows_load), :].astype(jnp.float32)
            t = t_ref[pl.ds(r0, nrows_load), :].astype(jnp.float32)
            d = x - t
            if nrows_keep < nrows_load:
                # Rows >= nrows_keep hold unspecified data (partial last HBM
                # block); select 0 before squaring / abs.
                rid = lax.broadcasted_iota(jnp.int32, (nrows_load, LANES), 0)
                d = jnp.where(rid < nrows_keep, d, 0.0)
            # (n, 128) -> (n//8, 8, 128) is a pure (8,128)-vreg-tile relabel.
            d3 = d.reshape(nrows_load // SUBLANES, SUBLANES, LANES)
            return jnp.sum(d3 * d3, axis=0), jnp.sum(jnp.abs(d3), axis=0)

        nfull = nrows_valid // chunk_r
        rem = nrows_valid % chunk_r

        sq, ab = zero, zero
        if nfull > 0:
            def body(c, carry):
                sq_c, ab_c = carry
                r0 = pl.multiple_of(c * chunk_r, chunk_r)
                dsq, dab = contrib(r0, chunk_r, chunk_r)
                return sq_c + dsq, ab_c + dab

            sq, ab = lax.fori_loop(0, nfull, body, (sq, ab), unroll=True)
        if rem > 0:
            # Tail chunk: load a sublane-aligned row count (stays inside the
            # (tile_r, 128) VMEM block buffer) and mask the over-read rows.
            r0 = nfull * chunk_r
            rem_load = _round_up(rem, SUBLANES)
            dsq, dab = contrib(r0, rem_load, rem)
            sq, ab = sq + dsq, ab + dab
        return sq, ab

    def kernel(x_ref, t_ref, sq_ref, ab_ref):
        i = pl.program_id(0)

        @pl.when(i == 0)
        def _init():
            sq_ref[...] = jnp.zeros_like(sq_ref)
            ab_ref[...] = jnp.zeros_like(ab_ref)

        def add_full():
            sq, ab = accum(x_ref, t_ref, tile_r)
            sq_ref[...] += sq
            ab_ref[...] += ab

        def add_tail():
            sq, ab = accum(x_ref, t_ref, last_valid)
            sq_ref[...] += sq
            ab_ref[...] += ab

        if not ragged:
            add_full()                      # every block fully valid
        elif nsteps == 1:
            add_tail()                      # single, partially-valid block
        else:
            pl.when(i < nsteps - 1)(add_full)
            pl.when(i == nsteps - 1)(add_tail)

    return kernel


def scaled_mse_loss(x, target, eps=1e-8):
    """sum((x-t)**2) / (sum(|x-t|) + eps) with the reductions in Pallas."""
    assert x.shape == target.shape, (x.shape, target.shape)
    n = x.size

    xf = x.reshape(-1)
    tf = target.reshape(-1)

    rows = _cdiv(n, LANES)
    lane_pad = rows * LANES - n
    if lane_pad:
        # Only when numel % 128 != 0 (needed to form the lane-dense 2-D view).
        # Padding BOTH operands identically -> pad contributes exactly 0.
        xf = jnp.pad(xf, (0, lane_pad))
        tf = jnp.pad(tf, (0, lane_pad))

    x2 = xf.reshape(rows, LANES)
    t2 = tf.reshape(rows, LANES)

    tile_r = min(MAX_TILE_ROWS, _round_up(rows, SUBLANES))
    chunk_r = min(CHUNK_ROWS, tile_r)
    nsteps = _cdiv(rows, tile_r)
    last_valid = rows - (nsteps - 1) * tile_r   # valid rows in the last block

    kernel = _make_kernel(rows, tile_r, chunk_r, nsteps, last_valid)

    in_map = lambda i: (i, 0)
    if nsteps >= 3:
        # Deeper input pipelining hides DMA issue bubbles on long grids.
        in_spec = pl.BlockSpec((tile_r, LANES), in_map,
                               pipeline_mode=pl.Buffered(3))
    else:
        in_spec = pl.BlockSpec((tile_r, LANES), in_map)
    out_spec = pl.BlockSpec((SUBLANES, LANES), lambda i: (0, 0))

    sq_part, ab_part = pl.pallas_call(
        kernel,
        out_shape=(
            jax.ShapeDtypeStruct((SUBLANES, LANES), jnp.float32),
            jax.ShapeDtypeStruct((SUBLANES, LANES), jnp.float32),
        ),
        grid_spec=pltpu.PrefetchScalarGridSpec(
            num_scalar_prefetch=0,
            grid=(nsteps,),
            in_specs=[in_spec, in_spec],
            out_specs=(out_spec, out_spec),
        ),
        compiler_params=pltpu.CompilerParams(
            dimension_semantics=("arbitrary",),   # resident accumulator axis
            vmem_limit_bytes=48 * 1024 * 1024,
        ),
    )(x2, t2)

    # Final cross-sublane/lane reduce + eps add + divide: a handful of ops,
    # done once outside the kernel.
    sum_sq = jnp.sum(sq_part)
    sum_ab = jnp.sum(ab_part)
    return sum_sq / (sum_ab + jnp.float32(eps))


class ScaledMSELoss:
    """JAX port of style_transfer.ScaledMSELoss (Pallas reduction hot path)."""

    def __init__(self, eps=1e-8):
        self.eps = float(eps)

    def extra_repr(self):
        return f'eps={self.eps:g}'

    def __call__(self, input, target):
        return scaled_mse_loss(input, target, self.eps)


if __name__ == "__main__":
    key = jax.random.PRNGKey(0)
    k_in, k_tgt = jax.random.split(key)

    # Small NCHW activations consistent with the style-transfer usage.
    x = jax.random.normal(k_in, (2, 4, 16, 16), dtype=jnp.float32)
    target = jax.random.normal(k_tgt, (2, 4, 16, 16), dtype=jnp.float32)

    loss_mod = ScaledMSELoss(eps=1e-8)
    loss = loss_mod(x, target)
    loss = jax.block_until_ready(loss)

    # Sanity check against the plain-JAX reference of the PyTorch forward.
    diff = x - target
    ref = jnp.sum(diff ** 2) / (jnp.sum(jnp.abs(diff)) + jnp.float32(1e-8))
    assert jnp.allclose(loss, ref, rtol=1e-5, atol=1e-6), (loss, ref)

    print("KERNEL_OK")
</pallas_src>

<mosaic_0001>
module attributes {stable_mosaic.version = 11 : i64} {
  func.func @kernel(%arg0: i32, %arg1: memref<16x128xf32, #tpu.memory_space<vmem>>, %arg2: memref<16x128xf32, #tpu.memory_space<vmem>>, %arg3: memref<8x128xf32, #tpu.memory_space<vmem>>, %arg4: memref<8x128xf32, #tpu.memory_space<vmem>>) attributes {dimension_semantics = [#tpu.dimension_semantics<arbitrary>], iteration_bounds = array<i64: 1>, scalar_prefetch = 0 : i64, scratch_operands = 0 : i64, tpu.core_type = #tpu.core_type<tc>, window_params = [{transform_indices = @transform_0, window_bounds = array<i64: 16, 128>}, {transform_indices = @transform_1, window_bounds = array<i64: 16, 128>}, {pipeline_mode = #tpu.pipeline_mode<synchronous>, transform_indices = @transform_2, window_bounds = array<i64: 8, 128>}, {pipeline_mode = #tpu.pipeline_mode<synchronous>, transform_indices = @transform_3, window_bounds = array<i64: 8, 128>}]} {
    %c0_i32 = arith.constant 0 : i32
    %0 = arith.cmpi eq, %arg0, %c0_i32 : i32
    %1 = arith.extui %0 : i1 to i32
    %c0_i32_0 = arith.constant 0 : i32
    %2 = arith.cmpi ne, %1, %c0_i32_0 : i32
    scf.if %2 {
      %cst_13 = arith.constant 0.000000e+00 : f32
      %24 = vector.broadcast %cst_13 : f32 to vector<8x128xf32>
      %c0_14 = arith.constant 0 : index
      %c0_15 = arith.constant 0 : index
      %25 = vector.load %arg3[%c0_14, %c0_15] : memref<8x128xf32, #tpu.memory_space<vmem>>, vector<8x128xf32>
      tpu.vector_store %arg3[%c0_14, %c0_15], %24 {strides = array<i32>} : memref<8x128xf32, #tpu.memory_space<vmem>>, vector<8x128xf32>,
      %cst_16 = arith.constant 0.000000e+00 : f32
      %26 = vector.broadcast %cst_16 : f32 to vector<8x128xf32>
      %c0_17 = arith.constant 0 : index
      %c0_18 = arith.constant 0 : index
      %27 = vector.load %arg4[%c0_17, %c0_18] : memref<8x128xf32, #tpu.memory_space<vmem>>, vector<8x128xf32>
      tpu.vector_store %arg4[%c0_17, %c0_18], %26 {strides = array<i32>} : memref<8x128xf32, #tpu.memory_space<vmem>>, vector<8x128xf32>,
    } else {
    }
    %cst = arith.constant 0.000000e+00 : f32
    %3 = vector.broadcast %cst : f32 to vector<8x128xf32>
    %c0_i32_1 = arith.constant 0 : i32
    %c16_i32 = arith.constant 16 : i32
    %4 = arith.muli %c0_i32_1, %c16_i32 : i32
    %5 = tpu.assume_multiple %4, 16 : i32
    %6 = arith.index_cast %5 : i32 to index
    %c0 = arith.constant 0 : index
    %7 = vector.load %arg1[%6, %c0] : memref<16x128xf32, #tpu.memory_space<vmem>>, vector<16x128xf32>
    %8 = arith.index_cast %5 : i32 to index
    %c0_2 = arith.constant 0 : index
    %9 = vector.load %arg2[%8, %c0_2] : memref<16x128xf32, #tpu.memory_space<vmem>>, vector<16x128xf32>
    %10 = arith.subf %7, %9 : vector<16x128xf32>
    %11 = vector.shape_cast %10 : vector<16x128xf32> to vector<2x8x128xf32>
    %12 = arith.mulf %11, %11 : vector<2x8x128xf32>
    %cst_3 = arith.constant dense<0.000000e+00> : vector<8x128xf32>
    %13 = vector.multi_reduction <add>, %12, %cst_3 [0] : vector<2x8x128xf32> to vector<8x128xf32>
    %14 = math.absf %11 : vector<2x8x128xf32>
    %cst_4 = arith.constant dense<0.000000e+00> : vector<8x128xf32>
    %15 = vector.multi_reduction <add>, %14, %cst_4 [0] : vector<2x8x128xf32> to vector<8x128xf32>
    %16 = arith.addf %3, %13 : vector<8x128xf32>
    %17 = arith.addf %3, %15 : vector<8x128xf32>
    %c1_i32 = arith.constant 1 : i32
    %c0_5 = arith.constant 0 : index
    %c0_6 = arith.constant 0 : index
    %18 = vector.load %arg3[%c0_5, %c0_6] : memref<8x128xf32, #tpu.memory_space<vmem>>, vector<8x128xf32>
    %19 = arith.addf %18, %16 : vector<8x128xf32>
    %c0_7 = arith.constant 0 : index
    %c0_8 = arith.constant 0 : index
    %20 = vector.load %arg3[%c0_7, %c0_8] : memref<8x128xf32, #tpu.memory_space<vmem>>, vector<8x128xf32>
    tpu.vector_store %arg3[%c0_7, %c0_8], %19 {strides = array<i32>} : memref<8x128xf32, #tpu.memory_space<vmem>>, vector<8x128xf32>,
    %c0_9 = arith.constant 0 : index
    %c0_10 = arith.constant 0 : index
    %21 = vector.load %arg4[%c0_9, %c0_10] : memref<8x128xf32, #tpu.memory_space<vmem>>, vector<8x128xf32>
    %22 = arith.addf %21, %17 : vector<8x128xf32>
    %c0_11 = arith.constant 0 : index
    %c0_12 = arith.constant 0 : index
    %23 = vector.load %arg4[%c0_11, %c0_12] : memref<8x128xf32, #tpu.memory_space<vmem>>, vector<8x128xf32>
    tpu.vector_store %arg4[%c0_11, %c0_12], %22 {strides = array<i32>} : memref<8x128xf32, #tpu.memory_space<vmem>>, vector<8x128xf32>,
    return
  }
  func.func @transform_0(%arg0: i32) -> (i32, i32) {
    %c0_i32 = arith.constant 0 : i32
    %c0_i32_0 = arith.constant 0 : i32
    return %arg0, %c0_i32 : i32, i32
  }
  func.func @transform_1(%arg0: i32) -> (i32, i32) {
    %c0_i32 = arith.constant 0 : i32
    %c0_i32_0 = arith.constant 0 : i32
    return %arg0, %c0_i32 : i32, i32
  }
  func.func @transform_2(%arg0: i32) -> (i32, i32) {
    %c0_i32 = arith.constant 0 : i32
    %c0_i32_0 = arith.constant 0 : i32
    %c0_i32_1 = arith.constant 0 : i32
    return %c0_i32, %c0_i32_0 : i32, i32
  }
  func.func @transform_3(%arg0: i32) -> (i32, i32) {
    %c0_i32 = arith.constant 0 : i32
    %c0_i32_0 = arith.constant 0 : i32
    %c0_i32_1 = arith.constant 0 : i32
    return %c0_i32, %c0_i32_0 : i32, i32
  }
}

</mosaic_0001>

<llo_original>
// kernel: tpu_custom_call.1
$region0: #{tpu_custom_call.1}
  #allocation0 [shape = 'u32[]', space=smem, size = 0x4, offset = 0x4, fixed_abs, tag = 'smem constant byte address 0x4 - core index']
  #allocation1 [shape = 'u32[144,128]{1,0:T(1,128)}', space=vmem, size = 0x12000, scoped, tag = 'internal scratch']
  %s0 = inlined_call_operand.hbm [shape: f32[16,128], index: 0, kind: input, shape index: {}]
  %s1 = inlined_call_operand.hbm [shape: f32[16,128], index: 1, kind: input, shape index: {}]
  %s2 = inlined_call_operand.hbm [shape: f32[8,128], index: 2, kind: output, shape index: {0}]
  %s3 = inlined_call_operand.hbm [shape: f32[8,128], index: 3, kind: output, shape index: {1}]
  %4 = xla_tuple %s2, %s3
  %s5 = sld [smem:[#allocation0]]
  $region38: #{tpu_custom_call.1} parent=0
    _
  %s7 = ssub.s32 1, %s5
  %s8 = scalar_select 0, %s7, %s5
  $region1: #{tpu_custom_call.1} parent=0
    #allocation2 [shape = 'u8[8192]{0}', space=vmem, size = 0x2000, scoped, tag = 'input window, operand 0, single buffered']
    #allocation3 [shape = 's32[1]{0}', space=sflag, size = 0x4, scoped, tag = 'scoped memory for tpu_custom_call.1']
    #allocation4 [shape = 's32[1]{0}', space=sflag, size = 0x4, scoped, tag = 'scoped memory for tpu_custom_call.1']
    #allocation5 [shape = 'u8[8192]{0}', space=vmem, size = 0x2000, scoped, tag = 'input window, operand 1, single buffered']
    #allocation6 [shape = 's32[1]{0}', space=sflag, size = 0x4, scoped, tag = 'scoped memory for tpu_custom_call.1']
    #allocation7 [shape = 'u8[4096]{0}', space=vmem, size = 0x1000, scoped, tag = 'output window, operand 0, single buffered']
    #allocation8 [shape = 'u8[4096]{0}', space=vmem, size = 0x1000, scoped, tag = 'output window, operand 1, single buffered']
    #allocation9 [shape = 's32[1]{0}', space=sflag, size = 0x4, scoped, tag = 'scoped memory for tpu_custom_call.1']
    %9 = vsyncpa [#allocation3], 0
    %10 = vsyncpa [#allocation6], 0
    %11 = vsyncpa [#allocation4], 0
    %12 = vsyncpa [#allocation9], 0
    // Predicated region
    $region2: #{tpu_custom_call.1} parent=1 // pred_check
      _
    $region3: #{tpu_custom_call.1} parent=1 // pred_check_branch
      %14 = sbr.rel (0) target = $region5
    $region4: #{tpu_custom_call.1} parent=1 // pred_region
      %s16 = ssub.s32 256, 256
      %17 = vsyncadd [#allocation3], %s16
      %s18 = sshll.u32 [#allocation2], 4
      %s19 = int_to_ptr.vmem [resolvable:$true] %s18
      %24 = dma.hbm_to_vmem [thread:$0]  %s0, 256, %s19, [#allocation3], 128, 128, 8
    $region5: #{tpu_custom_call.1} parent=1 // pred_fallthru
      _
    // Predicated region
    $region6: #{tpu_custom_call.1} parent=1 // pred_check
      _
    $region7: #{tpu_custom_call.1} parent=1 // pred_check_branch
      %26 = sbr.rel (0) target = $region9
    $region8: #{tpu_custom_call.1} parent=1 // pred_region
      %s28 = ssub.s32 256, 256
      %29 = vsyncadd [#allocation6], %s28
      %s30 = sshll.u32 [#allocation5], 4
      %s31 = int_to_ptr.vmem [resolvable:$true] %s30
      %36 = dma.hbm_to_vmem [thread:$0]  %s1, 256, %s31, [#allocation6], 128, 128, 8
    $region9: #{tpu_custom_call.1} parent=1 // pred_fallthru
      _
    // Predicated region
    $region10: #{tpu_custom_call.1} parent=1 // pred_check
      _
    $region11: #{tpu_custom_call.1} parent=1 // pred_check_branch
      %38 = sbr.rel (0) target = $region13
    $region12: #{tpu_custom_call.1} parent=1 // pred_region
      %39 = dma.done [#allocation3], 256
    $region13: #{tpu_custom_call.1} parent=1 // pred_fallthru
      _
    // Predicated region
    $region14: #{tpu_custom_call.1} parent=1 // pred_check
      _
    $region15: #{tpu_custom_call.1} parent=1 // pred_check_branch
      %41 = sbr.rel (0) target = $region17
    $region16: #{tpu_custom_call.1} parent=1 // pred_region
      %42 = dma.done [#allocation6], 256
    $region17: #{tpu_custom_call.1} parent=1 // pred_fallthru
      _
    %p43 = scmp.eq.s32.totalorder 0, 0
    // Predicated region
    $region18: #{tpu_custom_call.1} parent=1 // pred_check
      %p44 = pneg %p43
    $region19: #{tpu_custom_call.1} parent=1 // pred_check_branch
      %46 = sbr.rel (%p44) target = $region21
    $region20: #{tpu_custom_call.1} parent=1 // pred_region
      %47 = vst [vmem:[#allocation7] sm:$0xff] 0.0
      %48 = vst [vmem:[#allocation8] sm:$0xff] 0.0
    $region21: #{tpu_custom_call.1} parent=1 // pred_fallthru
      _
    %v49 = vld [vmem:[#allocation2] sm:$0xff]
    %v50 = vld [vmem:[#allocation2 + $0x8] sm:$0xff]
    %v51 = vld [vmem:[#allocation5] sm:$0xff]
    %v52 = vld [vmem:[#allocation5 + $0x8] sm:$0xff]
    %v53 = vsub.f32 %v49, %v51
    %v54 = vsub.f32 %v50, %v52
    %v55 = vmul.f32 %v53, %v53
    %v56 = vmul.f32 %v54, %v54
    %v57 = vadd.f32 %v55, %v56
    %v58 = vand.u32 2147483647, %v53
    %v59 = vand.u32 2147483647, %v54
    %v60 = vadd.f32 %v58, %v59
    %v61 = vadd.f32 %v57, 0.0
    %v62 = vadd.f32 %v60, 0.0
    %v63 = vld [vmem:[#allocation7] sm:$0xff]
    %v64 = vadd.f32 %v63, %v61
    %65 = vst [vmem:[#allocation7] sm:$0xff] %v64
    %v66 = vld [vmem:[#allocation8] sm:$0xff]
    %v67 = vadd.f32 %v66, %v62
    %68 = vst [vmem:[#allocation8] sm:$0xff] %v67
    // Predicated region
    $region22: #{tpu_custom_call.1} parent=1 // pred_check
      _
    $region23: #{tpu_custom_call.1} parent=1 // pred_check_branch
      %70 = sbr.rel (0) target = $region25
    $region24: #{tpu_custom_call.1} parent=1 // pred_region
      %s72 = ssub.s32 128, 128
      %73 = vsyncadd [#allocation4], %s72
      %s75 = sshll.u32 [#allocation7], 4
      %s76 = int_to_ptr.vmem [resolvable:$true] %s75
      %78 = dma.vmem_to_hbm [thread:$0]  %s76, 128, %s2, [#allocation4]
    $region25: #{tpu_custom_call.1} parent=1 // pred_fallthru
      _
    // Predicated region
    $region26: #{tpu_custom_call.1} parent=1 // pred_check
      _
    $region27: #{tpu_custom_call.1} parent=1 // pred_check_branch
      %80 = sbr.rel (0) target = $region29
    $region28: #{tpu_custom_call.1} parent=1 // pred_region
      %s82 = ssub.s32 128, 128
      %83 = vsyncadd [#allocation9], %s82
      %s85 = sshll.u32 [#allocation8], 4
      %s86 = int_to_ptr.vmem [resolvable:$true] %s85
      %88 = dma.vmem_to_hbm [thread:$0]  %s86, 128, %s3, [#allocation9]
    $region29: #{tpu_custom_call.1} parent=1 // pred_fallthru
      _
    // Predicated region
    $region30: #{tpu_custom_call.1} parent=1 // pred_check
      _
    $region31: #{tpu_custom_call.1} parent=1 // pred_check_branch
      %90 = sbr.rel (0) target = $region33
    $region32: #{tpu_custom_call.1} parent=1 // pred_region
      %91 = dma.done [#allocation4], 128
    $region33: #{tpu_custom_call.1} parent=1 // pred_fallthru
      _
    // Predicated region
    $region34: #{tpu_custom_call.1} parent=1 // pred_check
      _
    $region35: #{tpu_custom_call.1} parent=1 // pred_check_branch
      %93 = sbr.rel (0) target = $region37
    $region36: #{tpu_custom_call.1} parent=1 // pred_region
      %94 = dma.done [#allocation9], 128
    $region37: #{tpu_custom_call.1} parent=1 // pred_fallthru
      _
    %95 = vsyncpa [#allocation3], 1
    %96 = vsyncpa [#allocation6], 1
    %97 = vsyncpa [#allocation4], 1
    %98 = vsyncpa [#allocation9], 1

</llo_original>
